<compile_context>
chip_gen: v5e
topology: v5e:2x2
jax: 0.10.0
libtpu: 0.0.40
codegen_flags: <defaults>
</compile_context>

<pallas_src>
import jax
import jax.numpy as jnp
from jax.experimental import pallas as pl
from jax.experimental.pallas import tpu as pltpu

# ---------------- model hyper-parameters (small & synthetic) ----------------
INPUT_SIZE = 16          # obs_size
HIDDEN_SIZE = 32         # hidden_size
OUTPUT_SIZE = 8          # act_size
NUM_HIDDEN_LAYERS = 3
MAX_ACTION = 2.0

BATCH = 16               # total batch (grid collapses to (1,) at this size)
OUT_PAD = 128            # lane-dense padded output width (multiple of 128)
FUSED_IN_W = (1 + NUM_HIDDEN_LAYERS) * HIDDEN_SIZE   # 4 * 32 = 128
MAX_TB = 512             # batch-tile rows once the batch grows (mult. of 16)


# ---------------------------- Pallas kernel ---------------------------------
def actor_kernel(x_ref, w_inp_ref, b_inp_ref, w_hx_ref, w_out_ref, b_out_ref,
                 o_ref):
    """Actor forward for one batch tile: dense MLP -> tanh -> * max_action."""
    inp_bf = x_ref[...].astype(jnp.bfloat16)           # (TB, IN)

    # One lane-full MXU push covering linear_in and every inp@W_i term,
    # followed by a SINGLE lane-dense bias add ([b_in | b_h0 | b_h1 | b_h2]):
    #   inp @ [w_in | w_hi[0] | ... | w_hi[L-1]] + b_fused  -> (TB, 128) f32
    inp_proj = jnp.dot(inp_bf, w_inp_ref[...],
                       preferred_element_type=jnp.float32) + b_inp_ref[...]

    # x = relu(linear_in(inp))   (bias already folded into inp_proj)
    h = jnp.maximum(inp_proj[:, :HIDDEN_SIZE], 0.0)

    # hidden layers: relu(cat([h, inp]) @ W + b) == relu(h@W_h + (inp@W_i + b))
    for i in range(NUM_HIDDEN_LAYERS):
        hx = jnp.dot(h.astype(jnp.bfloat16), w_hx_ref[i],
                     preferred_element_type=jnp.float32)
        hi = inp_proj[:, (i + 1) * HIDDEN_SIZE:(i + 2) * HIDDEN_SIZE]
        h = jnp.maximum(hx + hi, 0.0)

    # linear_out (zero-padded to a lane-dense 128-wide slab), tanh, scale.
    out = jnp.dot(h.astype(jnp.bfloat16), w_out_ref[...],
                  preferred_element_type=jnp.float32) + b_out_ref[...]
    o_ref[...] = (jnp.tanh(out) * MAX_ACTION).astype(o_ref.dtype)


# ------------------------------ wrapper --------------------------------------
def actor_forward(x, packed_params):
    (w_inp, b_inp, w_hx, w_out_pad, b_out_pad) = packed_params
    B = x.shape[0]
    # Collapse the grid for small batches; tile over batch for large ones
    # (weights stay resident across grid steps via constant index_maps).
    TB = B if B <= MAX_TB else MAX_TB
    assert B % TB == 0
    grid = (B // TB,)
    dims = ("parallel",) if grid[0] > 1 else ("arbitrary",)

    const2 = lambda i: (0, 0)
    const3 = lambda i: (0, 0, 0)

    # Advisory cost estimate for XLA's scheduler around the custom call.
    flops = 2 * B * (INPUT_SIZE * FUSED_IN_W
                     + NUM_HIDDEN_LAYERS * HIDDEN_SIZE * HIDDEN_SIZE
                     + HIDDEN_SIZE * OUT_PAD)
    transcendentals = B * OUT_PAD                                   # tanh lanes
    bytes_accessed = int(
        x.size * x.dtype.itemsize
        + sum(int(a.size) * a.dtype.itemsize for a in packed_params)
        + B * OUT_PAD * 4)

    out_padded = pl.pallas_call(
        actor_kernel,
        out_shape=jax.ShapeDtypeStruct((B, OUT_PAD), jnp.float32),
        grid_spec=pltpu.PrefetchScalarGridSpec(
            num_scalar_prefetch=0,
            grid=grid,
            in_specs=[
                pl.BlockSpec((TB, INPUT_SIZE), lambda i: (i, 0)),   # state tile
                pl.BlockSpec(w_inp.shape, const2),       # fused input weights (bf16)
                pl.BlockSpec(b_inp.shape, const2),       # fused biases (1,128) f32
                pl.BlockSpec(w_hx.shape, const3),        # hidden-h weights (bf16)
                pl.BlockSpec(w_out_pad.shape, const2),   # padded w_out (bf16)
                pl.BlockSpec(b_out_pad.shape, const2),   # padded b_out (f32)
            ],
            out_specs=pl.BlockSpec((TB, OUT_PAD), lambda i: (i, 0)),
        ),
        compiler_params=pltpu.CompilerParams(dimension_semantics=dims),
        cost_estimate=pl.CostEstimate(flops=flops,
                                      transcendentals=transcendentals,
                                      bytes_accessed=bytes_accessed),
    )(x, w_inp, b_inp, w_hx, w_out_pad, b_out_pad)

    # NOTE: this slice is a separate XLA copy; a downstream consumer may
    # instead accept the padded (B, 128) slab (columns 8..127 are zeros).
    return out_padded[:, :OUTPUT_SIZE]


# ------------------------ deterministic parameter init -----------------------
def init_params(key):
    """f32 'master' parameters, mirroring torch.nn.Linear's uniform init."""
    ks = jax.random.split(key, 7)
    s_in = 1.0 / jnp.sqrt(INPUT_SIZE)
    s_h = 1.0 / jnp.sqrt(HIDDEN_SIZE + INPUT_SIZE)
    s_out = 1.0 / jnp.sqrt(HIDDEN_SIZE)

    w_in = jax.random.uniform(ks[0], (INPUT_SIZE, HIDDEN_SIZE),
                              minval=-s_in, maxval=s_in, dtype=jnp.float32)
    b_in = jax.random.uniform(ks[1], (1, HIDDEN_SIZE),
                              minval=-s_in, maxval=s_in, dtype=jnp.float32)
    # hidden weight (H+IN, H) split into the H-part (w_hx) and IN-part (w_hi)
    w_hx = jax.random.uniform(ks[2], (NUM_HIDDEN_LAYERS, HIDDEN_SIZE, HIDDEN_SIZE),
                              minval=-s_h, maxval=s_h, dtype=jnp.float32)
    w_hi = jax.random.uniform(ks[3], (NUM_HIDDEN_LAYERS, INPUT_SIZE, HIDDEN_SIZE),
                              minval=-s_h, maxval=s_h, dtype=jnp.float32)
    b_h = jax.random.uniform(ks[4], (NUM_HIDDEN_LAYERS, 1, HIDDEN_SIZE),
                             minval=-s_h, maxval=s_h, dtype=jnp.float32)
    w_out = jax.random.uniform(ks[5], (HIDDEN_SIZE, OUTPUT_SIZE),
                               minval=-s_out, maxval=s_out, dtype=jnp.float32)
    b_out = jax.random.uniform(ks[6], (1, OUTPUT_SIZE),
                               minval=-s_out, maxval=s_out, dtype=jnp.float32)
    return (w_in, b_in, w_hx, w_hi, b_h, w_out, b_out)


def pack_params(params):
    """Wrapper-side layout plumbing (free): fuse input-path weights AND their
    biases into lane-dense slabs, cast MXU operands to bf16, zero-pad
    linear_out to a lane-dense width."""
    (w_in, b_in, w_hx, w_hi, b_h, w_out, b_out) = params
    # [w_in | w_hi[0] | ... | w_hi[L-1]]  -> (IN, (1+L)*H) = (16, 128)
    w_inp = jnp.concatenate(
        [w_in] + [w_hi[i] for i in range(NUM_HIDDEN_LAYERS)], axis=1
    ).astype(jnp.bfloat16)
    # [b_in | b_h0 | b_h1 | b_h2]  -> (1, 128) f32, column order matches w_inp
    b_inp = jnp.concatenate(
        [b_in] + [b_h[i] for i in range(NUM_HIDDEN_LAYERS)], axis=1)
    w_hx_bf = w_hx.astype(jnp.bfloat16)
    w_out_pad = jnp.zeros((HIDDEN_SIZE, OUT_PAD), jnp.float32)
    w_out_pad = w_out_pad.at[:, :OUTPUT_SIZE].set(w_out).astype(jnp.bfloat16)
    b_out_pad = jnp.zeros((1, OUT_PAD), jnp.float32)
    b_out_pad = b_out_pad.at[:, :OUTPUT_SIZE].set(b_out)
    return (w_inp, b_inp, w_hx_bf, w_out_pad, b_out_pad)


# --------------------------- pure-JAX reference -------------------------------
def actor_ref(x, params):
    """f32 reference matching the PyTorch Actor.forward semantics exactly."""
    (w_in, b_in, w_hx, w_hi, b_h, w_out, b_out) = params
    inp = x
    h = jax.nn.relu(inp @ w_in + b_in)
    for i in range(NUM_HIDDEN_LAYERS):
        cat = jnp.concatenate([h, inp], axis=1)              # torch.cat([x, inp], 1)
        w_full = jnp.concatenate([w_hx[i], w_hi[i]], axis=0)
        h = jax.nn.relu(cat @ w_full + b_h[i])
    return jnp.tanh(h @ w_out + b_out) * MAX_ACTION


if __name__ == "__main__":
    key = jax.random.PRNGKey(0)
    k_x, k_p = jax.random.split(key)
    state = jax.random.normal(k_x, (BATCH, INPUT_SIZE), dtype=jnp.float32)
    params = init_params(k_p)
    packed = pack_params(params)

    action = actor_forward(state, packed)
    action = jax.block_until_ready(action)

    ref = actor_ref(state, params)
    assert action.shape == (BATCH, OUTPUT_SIZE)
    # bf16 MXU operands vs f32 reference -> loosened (but still tight) tolerance
    assert jnp.allclose(action, ref, atol=5e-2, rtol=5e-2), "mismatch vs reference"

    print("KERNEL_OK")
</pallas_src>

<mosaic_0001>
module attributes {stable_mosaic.version = 11 : i64} {
  func.func @actor_kernel(%arg0: i32, %arg1: memref<16x16xf32, #tpu.memory_space<vmem>>, %arg2: memref<16x128xbf16, #tpu.memory_space<vmem>>, %arg3: memref<1x128xf32, #tpu.memory_space<vmem>>, %arg4: memref<3x32x32xbf16, #tpu.memory_space<vmem>>, %arg5: memref<32x128xbf16, #tpu.memory_space<vmem>>, %arg6: memref<1x128xf32, #tpu.memory_space<vmem>>, %arg7: memref<16x128xf32, #tpu.memory_space<vmem>>) attributes {dimension_semantics = [#tpu.dimension_semantics<arbitrary>], iteration_bounds = array<i64: 1>, scalar_prefetch = 0 : i64, scratch_operands = 0 : i64, tpu.core_type = #tpu.core_type<tc>, window_params = [{transform_indices = @transform_0, window_bounds = array<i64: 16, 16>}, {pipeline_mode = #tpu.pipeline_mode<synchronous>, transform_indices = @transform_1, window_bounds = array<i64: 16, 128>}, {pipeline_mode = #tpu.pipeline_mode<synchronous>, transform_indices = @transform_2, window_bounds = array<i64: 1, 128>}, {pipeline_mode = #tpu.pipeline_mode<synchronous>, transform_indices = @transform_3, window_bounds = array<i64: 3, 32, 32>}, {pipeline_mode = #tpu.pipeline_mode<synchronous>, transform_indices = @transform_4, window_bounds = array<i64: 32, 128>}, {pipeline_mode = #tpu.pipeline_mode<synchronous>, transform_indices = @transform_5, window_bounds = array<i64: 1, 128>}, {transform_indices = @transform_6, window_bounds = array<i64: 16, 128>}]} {
    %c0 = arith.constant 0 : index
    %c0_0 = arith.constant 0 : index
    %0 = vector.load %arg1[%c0, %c0_0] : memref<16x16xf32, #tpu.memory_space<vmem>>, vector<16x16xf32>
    %1 = arith.truncf %0 : vector<16x16xf32> to vector<16x16xbf16>
    %c0_1 = arith.constant 0 : index
    %c0_2 = arith.constant 0 : index
    %2 = vector.load %arg2[%c0_1, %c0_2] : memref<16x128xbf16, #tpu.memory_space<vmem>>, vector<16x128xbf16>
    %cst = arith.constant dense<0.000000e+00> : vector<16x128xf32>
    %3 = tpu.matmul %1, %2, %cst {dimension_numbers = #tpu.dot_dimension_numbers<[1], [0], [0], [1], [0, 0, 1, 1], [], []>} : vector<16x16xbf16>, vector<16x128xbf16>, vector<16x128xf32> -> vector<16x128xf32>
    %c0_3 = arith.constant 0 : index
    %c0_4 = arith.constant 0 : index
    %4 = vector.load %arg3[%c0_3, %c0_4] : memref<1x128xf32, #tpu.memory_space<vmem>>, vector<1x128xf32>
    %5 = vector.broadcast %4 : vector<1x128xf32> to vector<16x128xf32>
    %6 = arith.addf %3, %5 : vector<16x128xf32>
    %7 = vector.extract_strided_slice %6 {offsets = [0, 0], sizes = [16, 32], strides = [1, 1]} : vector<16x128xf32> to vector<16x32xf32>
    %cst_5 = arith.constant 0.000000e+00 : f32
    %8 = vector.broadcast %cst_5 : f32 to vector<16x32xf32>
    %9 = arith.maximumf %7, %8 : vector<16x32xf32>
    %10 = arith.truncf %9 : vector<16x32xf32> to vector<16x32xbf16>
    %c0_6 = arith.constant 0 : index
    %c0_7 = arith.constant 0 : index
    %c0_8 = arith.constant 0 : index
    %11 = vector.load %arg4[%c0_6, %c0_7, %c0_8] : memref<3x32x32xbf16, #tpu.memory_space<vmem>>, vector<1x32x32xbf16>
    %12 = vector.shape_cast %11 : vector<1x32x32xbf16> to vector<32x32xbf16>
    %cst_9 = arith.constant dense<0.000000e+00> : vector<16x32xf32>
    %13 = tpu.matmul %10, %12, %cst_9 {dimension_numbers = #tpu.dot_dimension_numbers<[1], [0], [0], [1], [0, 0, 1, 1], [], []>} : vector<16x32xbf16>, vector<32x32xbf16>, vector<16x32xf32> -> vector<16x32xf32>
    %14 = vector.extract_strided_slice %6 {offsets = [0, 32], sizes = [16, 32], strides = [1, 1]} : vector<16x128xf32> to vector<16x32xf32>
    %15 = arith.addf %13, %14 : vector<16x32xf32>
    %cst_10 = arith.constant 0.000000e+00 : f32
    %16 = vector.broadcast %cst_10 : f32 to vector<16x32xf32>
    %17 = arith.maximumf %15, %16 : vector<16x32xf32>
    %18 = arith.truncf %17 : vector<16x32xf32> to vector<16x32xbf16>
    %c1 = arith.constant 1 : index
    %c0_11 = arith.constant 0 : index
    %c0_12 = arith.constant 0 : index
    %19 = vector.load %arg4[%c1, %c0_11, %c0_12] : memref<3x32x32xbf16, #tpu.memory_space<vmem>>, vector<1x32x32xbf16>
    %20 = vector.shape_cast %19 : vector<1x32x32xbf16> to vector<32x32xbf16>
    %cst_13 = arith.constant dense<0.000000e+00> : vector<16x32xf32>
    %21 = tpu.matmul %18, %20, %cst_13 {dimension_numbers = #tpu.dot_dimension_numbers<[1], [0], [0], [1], [0, 0, 1, 1], [], []>} : vector<16x32xbf16>, vector<32x32xbf16>, vector<16x32xf32> -> vector<16x32xf32>
    %22 = vector.extract_strided_slice %6 {offsets = [0, 64], sizes = [16, 32], strides = [1, 1]} : vector<16x128xf32> to vector<16x32xf32>
    %23 = arith.addf %21, %22 : vector<16x32xf32>
    %cst_14 = arith.constant 0.000000e+00 : f32
    %24 = vector.broadcast %cst_14 : f32 to vector<16x32xf32>
    %25 = arith.maximumf %23, %24 : vector<16x32xf32>
    %26 = arith.truncf %25 : vector<16x32xf32> to vector<16x32xbf16>
    %c2 = arith.constant 2 : index
    %c0_15 = arith.constant 0 : index
    %c0_16 = arith.constant 0 : index
    %27 = vector.load %arg4[%c2, %c0_15, %c0_16] : memref<3x32x32xbf16, #tpu.memory_space<vmem>>, vector<1x32x32xbf16>
    %28 = vector.shape_cast %27 : vector<1x32x32xbf16> to vector<32x32xbf16>
    %cst_17 = arith.constant dense<0.000000e+00> : vector<16x32xf32>
    %29 = tpu.matmul %26, %28, %cst_17 {dimension_numbers = #tpu.dot_dimension_numbers<[1], [0], [0], [1], [0, 0, 1, 1], [], []>} : vector<16x32xbf16>, vector<32x32xbf16>, vector<16x32xf32> -> vector<16x32xf32>
    %30 = vector.extract_strided_slice %6 {offsets = [0, 96], sizes = [16, 32], strides = [1, 1]} : vector<16x128xf32> to vector<16x32xf32>
    %31 = arith.addf %29, %30 : vector<16x32xf32>
    %cst_18 = arith.constant 0.000000e+00 : f32
    %32 = vector.broadcast %cst_18 : f32 to vector<16x32xf32>
    %33 = arith.maximumf %31, %32 : vector<16x32xf32>
    %34 = arith.truncf %33 : vector<16x32xf32> to vector<16x32xbf16>
    %c0_19 = arith.constant 0 : index
    %c0_20 = arith.constant 0 : index
    %35 = vector.load %arg5[%c0_19, %c0_20] : memref<32x128xbf16, #tpu.memory_space<vmem>>, vector<32x128xbf16>
    %cst_21 = arith.constant dense<0.000000e+00> : vector<16x128xf32>
    %36 = tpu.matmul %34, %35, %cst_21 {dimension_numbers = #tpu.dot_dimension_numbers<[1], [0], [0], [1], [0, 0, 1, 1], [], []>} : vector<16x32xbf16>, vector<32x128xbf16>, vector<16x128xf32> -> vector<16x128xf32>
    %c0_22 = arith.constant 0 : index
    %c0_23 = arith.constant 0 : index
    %37 = vector.load %arg6[%c0_22, %c0_23] : memref<1x128xf32, #tpu.memory_space<vmem>>, vector<1x128xf32>
    %38 = vector.broadcast %37 : vector<1x128xf32> to vector<16x128xf32>
    %39 = arith.addf %36, %38 : vector<16x128xf32>
    %40 = math.tanh %39 : vector<16x128xf32>
    %cst_24 = arith.constant 2.000000e+00 : f32
    %41 = vector.broadcast %cst_24 : f32 to vector<16x128xf32>
    %42 = arith.mulf %40, %41 : vector<16x128xf32>
    %c0_25 = arith.constant 0 : index
    %c0_26 = arith.constant 0 : index
    %43 = vector.load %arg7[%c0_25, %c0_26] : memref<16x128xf32, #tpu.memory_space<vmem>>, vector<16x128xf32>
    tpu.vector_store %arg7[%c0_25, %c0_26], %42 {strides = array<i32>} : memref<16x128xf32, #tpu.memory_space<vmem>>, vector<16x128xf32>,
    return
  }
  func.func @transform_0(%arg0: i32) -> (i32, i32) {
    %c0_i32 = arith.constant 0 : i32
    %c0_i32_0 = arith.constant 0 : i32
    return %arg0, %c0_i32 : i32, i32
  }
  func.func @transform_1(%arg0: i32) -> (i32, i32) {
    %c0_i32 = arith.constant 0 : i32
    %c0_i32_0 = arith.constant 0 : i32
    %c0_i32_1 = arith.constant 0 : i32
    return %c0_i32, %c0_i32_0 : i32, i32
  }
  func.func @transform_2(%arg0: i32) -> (i32, i32) {
    %c0_i32 = arith.constant 0 : i32
    %c0_i32_0 = arith.constant 0 : i32
    %c0_i32_1 = arith.constant 0 : i32
    return %c0_i32, %c0_i32_0 : i32, i32
  }
  func.func @transform_3(%arg0: i32) -> (i32, i32, i32) {
    %c0_i32 = arith.constant 0 : i32
    %c0_i32_0 = arith.constant 0 : i32
    %c0_i32_1 = arith.constant 0 : i32
    %c0_i32_2 = arith.constant 0 : i32
    return %c0_i32, %c0_i32_0, %c0_i32_1 : i32, i32, i32
  }
  func.func @transform_4(%arg0: i32) -> (i32, i32) {
    %c0_i32 = arith.constant 0 : i32
    %c0_i32_0 = arith.constant 0 : i32
    %c0_i32_1 = arith.constant 0 : i32
    return %c0_i32, %c0_i32_0 : i32, i32
  }
  func.func @transform_5(%arg0: i32) -> (i32, i32) {
    %c0_i32 = arith.constant 0 : i32
    %c0_i32_0 = arith.constant 0 : i32
    %c0_i32_1 = arith.constant 0 : i32
    return %c0_i32, %c0_i32_0 : i32, i32
  }
  func.func @transform_6(%arg0: i32) -> (i32, i32) {
    %c0_i32 = arith.constant 0 : i32
    %c0_i32_0 = arith.constant 0 : i32
    return %arg0, %c0_i32 : i32, i32
  }
}

</mosaic_0001>

<llo_original>
// kernel: tpu_custom_call.1
$region0: #{tpu_custom_call.1}
  #allocation0 [shape = 'u32[]', space=smem, size = 0x4, offset = 0x4, fixed_abs, tag = 'smem constant byte address 0x4 - core index']
  #allocation1 [shape = 'u32[72,128]{1,0:T(1,128)}', space=vmem, size = 0x9000, scoped, tag = 'internal scratch']
  %s0 = inlined_call_operand.hbm [shape: f32[16,16], index: 0, kind: input, shape index: {}]
  %s1 = inlined_call_operand.hbm [shape: bf16[16,128], index: 1, kind: input, shape index: {}]
  %s2 = inlined_call_operand.vmem [shape: f32[1,128], index: 2, kind: input, shape index: {}]
  %s3 = inlined_call_operand.hbm [shape: bf16[3,32,32], index: 3, kind: input, shape index: {}]
  %s4 = inlined_call_operand.hbm [shape: bf16[32,128], index: 4, kind: input, shape index: {}]
  %s5 = inlined_call_operand.vmem [shape: f32[1,128], index: 5, kind: input, shape index: {}]
  %s6 = inlined_call_operand.hbm [shape: f32[16,128], index: 6, kind: output, shape index: {}]
  %s7 = sld [smem:[#allocation0]]
  $region50: #{tpu_custom_call.1} parent=0
    _
  %s9 = ssub.s32 1, %s7
  %s10 = scalar_select 0, %s9, %s7
  $region1: #{tpu_custom_call.1} parent=0
    #allocation2 [shape = 'u8[8192]{0}', space=vmem, size = 0x2000, scoped, tag = 'input window, operand 0, single buffered']
    #allocation3 [shape = 's32[1]{0}', space=sflag, size = 0x4, scoped, tag = 'scoped memory for tpu_custom_call.1']
    #allocation4 [shape = 's32[1]{0}', space=sflag, size = 0x4, scoped, tag = 'scoped memory for tpu_custom_call.1']
    #allocation5 [shape = 'u8[4096]{0}', space=vmem, size = 0x1000, scoped, tag = 'input window, operand 1, single buffered']
    #allocation6 [shape = 's32[1]{0}', space=sflag, size = 0x4, scoped, tag = 'scoped memory for tpu_custom_call.1']
    #allocation7 [shape = 'u8[24576]{0}', space=vmem, size = 0x6000, scoped, tag = 'input window, operand 3, single buffered']
    #allocation8 [shape = 'u8[8192]{0}', space=vmem, size = 0x2000, scoped, tag = 'input window, operand 4, single buffered']
    #allocation9 [shape = 's32[1]{0}', space=sflag, size = 0x4, scoped, tag = 'scoped memory for tpu_custom_call.1']
    #allocation10 [shape = 'u8[8192]{0}', space=vmem, size = 0x2000, scoped, tag = 'output window, operand 0, single buffered']
    %11 = vsyncpa [#allocation3], 0
    %12 = vsyncpa [#allocation6], 0
    %13 = vsyncpa [#allocation9], 0
    %14 = vsyncpa [#allocation4], 0
    // Predicated region
    $region2: #{tpu_custom_call.1} parent=1 // pred_check
      _
    $region3: #{tpu_custom_call.1} parent=1 // pred_check_branch
      %16 = sbr.rel (0) target = $region5
    $region4: #{tpu_custom_call.1} parent=1 // pred_region
      %18 = vsyncadd [#allocation3], 0
      %s19 = sshll.u32 %s0, 4
      %s20 = int_to_ptr.hbm [resolvable:$true] %s19
      %s21 = sshll.u32 [#allocation2], 4
      %s22 = int_to_ptr.vmem [resolvable:$true] %s21
      %27 = dma.hbm_to_vmem [thread:$0]  %s20, 256, %s22, [#allocation3], 128, 128, 8
    $region5: #{tpu_custom_call.1} parent=1 // pred_fallthru
      _
    // Predicated region
    $region6: #{tpu_custom_call.1} parent=1 // pred_check
      _
    $region7: #{tpu_custom_call.1} parent=1 // pred_check_branch
      %29 = sbr.rel (0) target = $region9
    $region8: #{tpu_custom_call.1} parent=1 // pred_region
      %31 = vsyncadd [#allocation6], 0
      %s32 = sshll.u32 %s1, 4
      %s33 = int_to_ptr.hbm [resolvable:$true] %s32
      %s34 = sshll.u32 [#allocation5], 4
      %s35 = int_to_ptr.vmem [resolvable:$true] %s34
      %40 = dma.hbm_to_vmem [thread:$0]  %s33, 128, %s35, [#allocation6], 64, 64, 4
    $region9: #{tpu_custom_call.1} parent=1 // pred_fallthru
      _
    // Predicated region
    $region10: #{tpu_custom_call.1} parent=1 // pred_check
      _
    $region11: #{tpu_custom_call.1} parent=1 // pred_check_branch
      %42 = sbr.rel (0) target = $region13
    $region12: #{tpu_custom_call.1} parent=1 // pred_region
      _
    $region13: #{tpu_custom_call.1} parent=1 // pred_fallthru
      _
    // Predicated region
    $region14: #{tpu_custom_call.1} parent=1 // pred_check
      _
    $region15: #{tpu_custom_call.1} parent=1 // pred_check_branch
      %44 = sbr.rel (0) target = $region17
    $region16: #{tpu_custom_call.1} parent=1 // pred_region
      %46 = vsyncadd [#allocation6], 0
      %s47 = sshll.u32 %s3, 4
      %s48 = int_to_ptr.hbm [resolvable:$true] %s47
      %s49 = sshll.u32 [#allocation7], 4
      %s50 = int_to_ptr.vmem [resolvable:$true] %s49
      %55 = dma.hbm_to_vmem [thread:$0]  %s48, 768, %s50, [#allocation6], 64, 64, 4
    $region17: #{tpu_custom_call.1} parent=1 // pred_fallthru
      _
    // Predicated region
    $region18: #{tpu_custom_call.1} parent=1 // pred_check
      _
    $region19: #{tpu_custom_call.1} parent=1 // pred_check_branch
      %57 = sbr.rel (0) target = $region21
    $region20: #{tpu_custom_call.1} parent=1 // pred_region
      %59 = vsyncadd [#allocation9], 0
      %s60 = sshll.u32 %s4, 4
      %s61 = int_to_ptr.hbm [resolvable:$true] %s60
      %s62 = sshll.u32 [#allocation8], 4
      %s63 = int_to_ptr.vmem [resolvable:$true] %s62
      %68 = dma.hbm_to_vmem [thread:$0]  %s61, 256, %s63, [#allocation9], 64, 64, 4
    $region21: #{tpu_custom_call.1} parent=1 // pred_fallthru
      _
    // Predicated region
    $region22: #{tpu_custom_call.1} parent=1 // pred_check
      _
    $region23: #{tpu_custom_call.1} parent=1 // pred_check_branch
      %70 = sbr.rel (0) target = $region25
    $region24: #{tpu_custom_call.1} parent=1 // pred_region
      _
    $region25: #{tpu_custom_call.1} parent=1 // pred_fallthru
      _
    // Predicated region
    $region26: #{tpu_custom_call.1} parent=1 // pred_check
      _
    $region27: #{tpu_custom_call.1} parent=1 // pred_check_branch
      %72 = sbr.rel (0) target = $region29
    $region28: #{tpu_custom_call.1} parent=1 // pred_region
      %74 = dma.done [#allocation3], 256
    $region29: #{tpu_custom_call.1} parent=1 // pred_fallthru
      _
    // Predicated region
    $region30: #{tpu_custom_call.1} parent=1 // pred_check
      _
    $region31: #{tpu_custom_call.1} parent=1 // pred_check_branch
      %76 = sbr.rel (0) target = $region33
    $region32: #{tpu_custom_call.1} parent=1 // pred_region
      %78 = dma.done [#allocation6], 128
    $region33: #{tpu_custom_call.1} parent=1 // pred_fallthru
      _
    // Predicated region
    $region34: #{tpu_custom_call.1} parent=1 // pred_check
      _
    $region35: #{tpu_custom_call.1} parent=1 // pred_check_branch
      %80 = sbr.rel (0) target = $region37
    $region36: #{tpu_custom_call.1} parent=1 // pred_region
      %82 = dma.done [#allocation6], 768
    $region37: #{tpu_custom_call.1} parent=1 // pred_fallthru
      _
    // Predicated region
    $region38: #{tpu_custom_call.1} parent=1 // pred_check
      _
    $region39: #{tpu_custom_call.1} parent=1 // pred_check_branch
      %84 = sbr.rel (0) target = $region41
    $region40: #{tpu_custom_call.1} parent=1 // pred_region
      %86 = dma.done [#allocation9], 256
    $region41: #{tpu_custom_call.1} parent=1 // pred_fallthru
      _
    %v88 = vld [vmem:[#allocation2] sm:$0xff]
    %v89 = vld [vmem:[#allocation2 + $0x8] sm:$0xff]
    %v90 = vpack.c.bf16 %v89, %v88
    %v91 = vld [vmem:[#allocation5] sm:$0xf]
    %v92 = vld [vmem:[#allocation5 + $0x4] sm:$0xf]
    %v93 = vld [vmem:[%s2] sm:$0x1]
    %v95 = vperm.slane %v93, 0
    %v99 = vunpack.c.l.b16 %v91
    %v100 = vunpack.c.l.b16 %v92
    %v101 = vpack.c.b16 %v100, %v99
    %vm103 = vcmask 130048
    %v105 = vsel %vm103, %v90, 0
    %107 = vmatpush.bf16.msra.mxu0 0
    %108 = vmatpush.bf16.msra.mxu0 0
    %109 = vmatpush.bf16.msra.mxu0 0
    %110 = vmatpush.bf16.msra.mxu0 0
    %111 = vmatpush.bf16.msra.mxu0 0
    %112 = vmatpush.bf16.msra.mxu0 0
    %113 = vmatpush.bf16.msra.mxu0 0
    %114 = vmatpush.bf16.msra.mxu0 %v101
    %115 = vmatmul.bf16.gmra.mxu0 %v105
    %v116 = vpop.f32.mrf.mxu0
    %v117 = vadd.f32 %v95, %v116
    %v118 = vpop.f32.mrf.mxu0
    %v119 = vadd.f32 %v95, %v118
    %120 = vdwg.mxu0
    %v121 = vmax.f32 %v117, 0.0
    %v122 = vmax.f32 %v119, 0.0
    %v123 = vpack.c.bf16 %v122, %v121
    %v124 = vld [vmem:[#allocation7] sm:$0xf]
    %v125 = vld [vmem:[#allocation7 + $0x4] sm:$0xf]
    %v126 = vld [vmem:[#allocation7 + $0x8] sm:$0xf]
    %v127 = vld [vmem:[#allocation7 + $0xc] sm:$0xf]
    %v132 = vunpack.c.l.b16 %v124
    %v133 = vunpack.c.l.b16 %v125
    %v134 = vunpack.c.l.b16 %v126
    %v135 = vunpack.c.l.b16 %v127
    %v136 = vpack.c.b16 %v133, %v132
    %v137 = vpack.c.b16 %v135, %v134
    %142 = vrot.lane.b32.xlu0 %v117, 96
    %v143 = vpop.permute.xlu0 %142
    %144 = vrot.lane.b32.xlu0 %v119, 96
    %v145 = vpop.permute.xlu0 %144
    %vm148 = vcmask 261120
    %v150 = vsel %vm148, %v123, 0
    %152 = vmatpush.bf16.msra.mxu0 0
    %153 = vmatpush.bf16.msra.mxu0 0
    %154 = vmatpush.bf16.msra.mxu0 0
    %155 = vmatpush.bf16.msra.mxu0 0
    %156 = vmatpush.bf16.msra.mxu0 0
    %157 = vmatpush.bf16.msra.mxu0 0
    %158 = vmatpush.bf16.msra.mxu0 %v137
    %159 = vmatpush.bf16.msra.mxu0 %v136
    %160 = vmatmul.bf16.gmra.mxu0 %v150
    %v161 = vpop.f32.mrf.mxu0
    %v162 = vadd.f32 %v143, %v161
    %v163 = vpop.f32.mrf.mxu0
    %v164 = vadd.f32 %v145, %v163
    %165 = vdwg.mxu0
    %v166 = vmax.f32 %v162, 0.0
    %v167 = vmax.f32 %v164, 0.0
    %v168 = vpack.c.bf16 %v167, %v166
    %s169 = scalar_lea.vmem [#allocation7], 16
    %v170 = vld [vmem:[%s169] sm:$0xf]
    %v171 = vld [vmem:[%s169 + $0x4] sm:$0xf]
    %v172 = vld [vmem:[%s169 + $0x8] sm:$0xf]
    %v173 = vld [vmem:[%s169 + $0xc] sm:$0xf]
    %v178 = vunpack.c.l.b16 %v170
    %v179 = vunpack.c.l.b16 %v171
    %v180 = vunpack.c.l.b16 %v172
    %v181 = vunpack.c.l.b16 %v173
    %v182 = vpack.c.b16 %v179, %v178
    %v183 = vpack.c.b16 %v181, %v180
    %186 = vrot.lane.b32.xlu0 %v117, 64
    %v187 = vpop.permute.xlu0 %186
    %188 = vrot.lane.b32.xlu0 %v119, 64
    %v189 = vpop.permute.xlu0 %188
    %v193 = vsel %vm148, %v168, 0
    %195 = vmatpush.bf16.msra.mxu0 0
    %196 = vmatpush.bf16.msra.mxu0 0
    %197 = vmatpush.bf16.msra.mxu0 0
    %198 = vmatpush.bf16.msra.mxu0 0
    %199 = vmatpush.bf16.msra.mxu0 0
    %200 = vmatpush.bf16.msra.mxu0 0
    %201 = vmatpush.bf16.msra.mxu0 %v183
    %202 = vmatpush.bf16.msra.mxu0 %v182
    %203 = vmatmul.bf16.gmra.mxu0 %v193
    %v204 = vpop.f32.mrf.mxu0
    %v205 = vadd.f32 %v187, %v204
    %v206 = vpop.f32.mrf.mxu0
    %v207 = vadd.f32 %v189, %v206
    %208 = vdwg.mxu0
    %v209 = vmax.f32 %v205, 0.0
    %v210 = vmax.f32 %v207, 0.0
    %v211 = vpack.c.bf16 %v210, %v209
    %s212 = scalar_lea.vmem [#allocation7], 32
    %v213 = vld [vmem:[%s212] sm:$0xf]
    %v214 = vld [vmem:[%s212 + $0x4] sm:$0xf]
    %v215 = vld [vmem:[%s212 + $0x8] sm:$0xf]
    %v216 = vld [vmem:[%s212 + $0xc] sm:$0xf]
    %v221 = vunpack.c.l.b16 %v213
    %v222 = vunpack.c.l.b16 %v214
    %v223 = vunpack.c.l.b16 %v215
    %v224 = vunpack.c.l.b16 %v216
    %v225 = vpack.c.b16 %v222, %v221
    %v226 = vpack.c.b16 %v224, %v223
    %229 = vrot.lane.b32.xlu0 %v117, 32
    %v230 = vpop.permute.xlu0 %229
    %231 = vrot.lane.b32.xlu0 %v119, 32
    %v232 = vpop.permute.xlu0 %231
    %v236 = vsel %vm148, %v211, 0
    %238 = vmatpush.bf16.msra.mxu0 0
    %239 = vmatpush.bf16.msra.mxu0 0
    %240 = vmatpush.bf16.msra.mxu0 0
    %241 = vmatpush.bf16.msra.mxu0 0
    %242 = vmatpush.bf16.msra.mxu0 0
    %243 = vmatpush.bf16.msra.mxu0 0
    %244 = vmatpush.bf16.msra.mxu0 %v226
    %245 = vmatpush.bf16.msra.mxu0 %v225
    %246 = vmatmul.bf16.gmra.mxu0 %v236
    %v247 = vpop.f32.mrf.mxu0
    %v248 = vadd.f32 %v230, %v247
    %v249 = vpop.f32.mrf.mxu0
    %v250 = vadd.f32 %v232, %v249
    %251 = vdwg.mxu0
    %v252 = vmax.f32 %v248, 0.0
    %v253 = vmax.f32 %v250, 0.0
    %v254 = vpack.c.bf16 %v253, %v252
    %v255 = vld [vmem:[#allocation8] sm:$0xf]
    %v256 = vld [vmem:[#allocation8 + $0x4] sm:$0xf]
    %v257 = vld [vmem:[#allocation8 + $0x8] sm:$0xf]
    %v258 = vld [vmem:[#allocation8 + $0xc] sm:$0xf]
    %v259 = vld [vmem:[%s5] sm:$0x1]
    %v261 = vperm.slane %v259, 0
    %v267 = vunpack.c.l.b16 %v255
    %v268 = vunpack.c.l.b16 %v256
    %v269 = vunpack.c.l.b16 %v257
    %v270 = vunpack.c.l.b16 %v258
    %v271 = vpack.c.b16 %v268, %v267
    %v272 = vpack.c.b16 %v270, %v269
    %v276 = vsel %vm148, %v254, 0
    %278 = vmatpush.bf16.msra.mxu0 0
    %279 = vmatpush.bf16.msra.mxu0 0
    %280 = vmatpush.bf16.msra.mxu0 0
    %281 = vmatpush.bf16.msra.mxu0 0
    %282 = vmatpush.bf16.msra.mxu0 0
    %283 = vmatpush.bf16.msra.mxu0 0
    %284 = vmatpush.bf16.msra.mxu0 %v272
    %285 = vmatpush.bf16.msra.mxu0 %v271
    %286 = vmatmul.bf16.gmra.mxu0 %v276
    %v287 = vpop.f32.mrf.mxu0
    %v288 = vadd.f32 %v261, %v287
    %v289 = vpop.f32.mrf.mxu0
    %v290 = vadd.f32 %v261, %v289
    %291 = vdwg.mxu0
    %v292 = vtanh.pop %v288
    %v293 = vtanh.pop %v290
    %v294 = vmul.f32 %v292, 2.0
    %v295 = vmul.f32 %v293, 2.0
    %296 = vst [vmem:[#allocation10] sm:$0xff] %v294
    %297 = vst [vmem:[#allocation10 + $0x8] sm:$0xff] %v295
    // Predicated region
    $region42: #{tpu_custom_call.1} parent=1 // pred_check
      _
    $region43: #{tpu_custom_call.1} parent=1 // pred_check_branch
      %299 = sbr.rel (0) target = $region45
    $region44: #{tpu_custom_call.1} parent=1 // pred_region
      %301 = vsyncadd [#allocation4], 0
      %s302 = sshll.u32 [#allocation10], 4
      %s303 = int_to_ptr.vmem [resolvable:$true] %s302
      %s304 = sshll.u32 %s6, 4
      %s305 = int_to_ptr.hbm [resolvable:$true] %s304
      %310 = dma.vmem_to_hbm [thread:$0]  %s303, 256, %s305, [#allocation4], 128, 128, 8
    $region45: #{tpu_custom_call.1} parent=1 // pred_fallthru
      _
    // Predicated region
    $region46: #{tpu_custom_call.1} parent=1 // pred_check
      _
    $region47: #{tpu_custom_call.1} parent=1 // pred_check_branch
      %312 = sbr.rel (0) target = $region49
    $region48: #{tpu_custom_call.1} parent=1 // pred_region
      %314 = dma.done [#allocation4], 256
    $region49: #{tpu_custom_call.1} parent=1 // pred_fallthru
      _
    %315 = vsyncpa [#allocation3], 1
    %316 = vsyncpa [#allocation6], 1
    %317 = vsyncpa [#allocation9], 1
    %318 = vsyncpa [#allocation4], 1

</llo_original>
